<compile_context>
chip_gen: v7x
topology: tpu7x:2x2x1
jax: 0.10.0
libtpu: 0.0.40
codegen_flags: <defaults>
</compile_context>

<pallas_src>
import functools

import jax
import jax.numpy as jnp
from jax.experimental import pallas as pl
from jax.experimental.pallas import tpu as pltpu

EPS = 1e-6
DEPTHS = (3, 3, 27, 3)
DIMS = (128, 256, 512, 1024)


def _vmem_limit_bytes():
    # 75% of physical VMEM (48 MiB on v7x, 96 MiB on v5e/v6e).
    try:
        cap = pltpu.get_tpu_info().vmem_capacity_bytes
    except Exception:
        cap = 64 * 1024 * 1024
    return int(cap * 3 // 4)


_VMEM_LIMIT = _vmem_limit_bytes()


def _cparams(sems=None):
    if sems is None:
        return pltpu.CompilerParams(vmem_limit_bytes=_VMEM_LIMIT)
    return pltpu.CompilerParams(dimension_semantics=sems,
                                vmem_limit_bytes=_VMEM_LIMIT)


def _row_block(rows, target=512):
    """Largest multiple-of-8 divisor of `rows` <= target (or full rows)."""
    if rows <= target:
        return rows
    b = (target // 8) * 8
    while b >= 8:
        if rows % b == 0:
            return b
        b -= 8
    return rows


def _gelu(x):
    # tanh-approx GELU: the transcendental goes to the EUP slot (free next to MXU/DMA).
    # TODO(synk): torch nn.GELU() default is the exact-erf form; this is the tanh approx.
    return 0.5 * x * (1.0 + jnp.tanh(0.7978845608028654 * (x + 0.044715 * x * x * x)))


def _ln(x, g, b):
    mu = jnp.mean(x, axis=-1, keepdims=True)
    xc = x - mu
    var = jnp.mean(xc * xc, axis=-1, keepdims=True)
    return xc * jax.lax.rsqrt(var + EPS) * g + b


# ----------------------------------------------------------------------------
# Kernel 1: stem matmul (im2col'd 4x4/4 conv) + bias + LayerNorm, row-tiled
# ----------------------------------------------------------------------------
def _stem_kernel(x_ref, w_ref, b_ref, g_ref, beta_ref, o_ref):
    y = jnp.dot(x_ref[...], w_ref[...],
                preferred_element_type=jnp.float32) + b_ref[...]
    o_ref[...] = _ln(y, g_ref[...], beta_ref[...])


def stem_matmul_ln(x, w, b, g, beta):
    M, K = x.shape
    N = w.shape[1]
    tr = _row_block(M)
    row = lambda i: (i, 0)
    full = lambda i: (0, 0)
    return pl.pallas_call(
        _stem_kernel,
        out_shape=jax.ShapeDtypeStruct((M, N), jnp.float32),
        grid=(M // tr,),
        in_specs=[pl.BlockSpec((tr, K), row),
                  pl.BlockSpec((K, N), full),
                  pl.BlockSpec((1, N), full),
                  pl.BlockSpec((1, N), full),
                  pl.BlockSpec((1, N), full)],
        out_specs=pl.BlockSpec((tr, N), row),
        compiler_params=_cparams(("parallel",)),
    )(x, w, b.reshape(1, N), g.reshape(1, N), beta.reshape(1, N))


# ----------------------------------------------------------------------------
# Kernel 2: ONE fused ConvNeXt stage.
#   grid=(depth,), "arbitrary".  Per-block weights are stacked with a leading
#   block axis (index_map = lambda b: (b,0,0)) so the pipeline prefetches block
#   b+1's weight slab during block b's compute.  The activation / residual
#   stream lives in the (constant-index) output block across the whole stage.
#   dwconv7 is computed on the flat (h,w,n)-ordered rows via a zero-padded
#   VMEM scratch + static row-offset slices + iota boundary masks.
# ----------------------------------------------------------------------------
def _stage_kernel(x_ref, dw_w_ref, dw_b_ref, ln_g_ref, ln_b_ref,
                  w1_ref, b1_ref, w2_ref, b2_ref, ls_ref,
                  o_ref, xpad_ref, *, H, W, N, P):
    R, C = o_ref.shape

    @pl.when(pl.program_id(0) == 0)
    def _():
        xpad_ref[...] = jnp.zeros_like(xpad_ref)   # pad rows stay zero for the stage
        o_ref[...] = x_ref[...]                    # load the stage input once

    x = o_ref[...]                                 # (R, C) residual stream
    xpad_ref[P:P + R, :] = x                       # center of the padded flat buffer

    # --- 7x7 depthwise conv (flat rows ordered (h, w, n)) ---
    r = jax.lax.broadcasted_iota(jnp.int32, (R, 1), 0)
    h_idx = r // (W * N)
    w_idx = (r // N) % W
    dw_w = dw_w_ref[0]                             # (49, C)
    acc = jnp.zeros((R, C), jnp.float32) + dw_b_ref[0]
    for kh in range(7):
        dh = kh - 3
        for kw in range(7):
            dwd = kw - 3
            off = P + (dh * W + dwd) * N           # static row offset, always >= 0
            src = xpad_ref[off:off + R, :]
            valid = ((h_idx + dh >= 0) & (h_idx + dh < H) &
                     (w_idx + dwd >= 0) & (w_idx + dwd < W))
            tap = kh * 7 + kw
            acc = acc + jnp.where(valid, src, 0.0) * dw_w[tap:tap + 1, :]

    # --- LN -> fc1 -> GELU -> fc2 -> layer_scale + residual ---
    t = _ln(acc, ln_g_ref[0], ln_b_ref[0])
    h = jnp.dot(t.astype(jnp.bfloat16), w1_ref[0],
                preferred_element_type=jnp.float32) + b1_ref[0]
    h = _gelu(h)
    z = jnp.dot(h.astype(jnp.bfloat16), w2_ref[0],
                preferred_element_type=jnp.float32) + b2_ref[0]
    # StochasticDepth is identity in eval mode.
    o_ref[...] = x + ls_ref[0] * z


def run_stage(x_flat, sp, H, W, N, C):
    depth = sp["dw_w"].shape[0]
    R = H * W * N
    C4 = 4 * C
    P0 = 3 * N * (W + 1)                 # minimum flat halo (3 rows + 3 cols of pad)
    P = ((P0 + 7) // 8) * 8              # 8-aligned store offset
    full = lambda b: (0, 0)
    stk = lambda b: (b, 0, 0)

    ce = pl.CostEstimate(
        flops=int(depth * (4 * R * C * C4 + 2 * 49 * R * C)),
        transcendentals=int(depth * R * C4),
        bytes_accessed=int(depth * (2 * C * C4 * 2 + 49 * C * 4 + 6 * C * 4 + C4 * 4)
                           + 2 * R * C * 4),
    )
    return pl.pallas_call(
        functools.partial(_stage_kernel, H=H, W=W, N=N, P=P),
        out_shape=jax.ShapeDtypeStruct((R, C), jnp.float32),
        grid=(depth,),
        in_specs=[pl.BlockSpec((R, C), full),          # stage input (fetched once)
                  pl.BlockSpec((1, 49, C), stk),       # dw taps
                  pl.BlockSpec((1, 1, C), stk),        # dw bias
                  pl.BlockSpec((1, 1, C), stk),        # ln gamma
                  pl.BlockSpec((1, 1, C), stk),        # ln beta
                  pl.BlockSpec((1, C, C4), stk),       # fc1 w (bf16)
                  pl.BlockSpec((1, 1, C4), stk),       # fc1 b
                  pl.BlockSpec((1, C4, C), stk),       # fc2 w (bf16)
                  pl.BlockSpec((1, 1, C), stk),        # fc2 b
                  pl.BlockSpec((1, 1, C), stk)],       # layer scale
        out_specs=pl.BlockSpec((R, C), full),
        scratch_shapes=[pltpu.VMEM((R + 2 * P, C), jnp.float32)],
        compiler_params=_cparams(("arbitrary",)),
        cost_estimate=ce,
    )(x_flat, sp["dw_w"], sp["dw_b"], sp["ln_g"], sp["ln_b"],
      sp["fc1_w"], sp["fc1_b"], sp["fc2_w"], sp["fc2_b"], sp["ls"])


# ----------------------------------------------------------------------------
# Kernel 3: fused LayerNorm + Conv2d(k=2, s=2) downsample
#           (single (rows, 4C) @ (4C, Cout) contraction)
# ----------------------------------------------------------------------------
def _downsample_kernel(x_ref, g_ref, b_ref, w_ref, bias_ref, o_ref, *, C):
    g = g_ref[...]
    b = b_ref[...]
    parts = [_ln(x_ref[:, i * C:(i + 1) * C], g, b) for i in range(4)]
    t = jnp.concatenate(parts, axis=-1).astype(jnp.bfloat16)
    o_ref[...] = (jnp.dot(t, w_ref[...], preferred_element_type=jnp.float32)
                  + bias_ref[...])


def ln_downsample(x_flat, H, W, N, C, ln_g, ln_b, w, bias):
    Ho, Wo = H // 2, W // 2
    Cout = w.shape[-1]
    M = Ho * Wo * N
    x4 = x_flat.reshape(H, W, N, C)
    views = [x4[i::2, j::2].reshape(M, C) for i in range(2) for j in range(2)]
    xcat = jnp.concatenate(views, axis=1)            # (M, 4C), tap-major channel blocks
    tr = _row_block(M)
    row = lambda i: (i, 0)
    full = lambda i: (0, 0)
    ce = pl.CostEstimate(flops=int(2 * M * 4 * C * Cout), transcendentals=0,
                         bytes_accessed=int(4 * C * Cout * 2 + M * 4 * C * 4))
    return pl.pallas_call(
        functools.partial(_downsample_kernel, C=C),
        out_shape=jax.ShapeDtypeStruct((M, Cout), jnp.float32),
        grid=(M // tr,),
        in_specs=[pl.BlockSpec((tr, 4 * C), row),
                  pl.BlockSpec((1, C), full),
                  pl.BlockSpec((1, C), full),
                  pl.BlockSpec((4 * C, Cout), full),
                  pl.BlockSpec((1, Cout), full)],
        out_specs=pl.BlockSpec((tr, Cout), row),
        compiler_params=_cparams(("parallel",)),
        cost_estimate=ce,
    )(xcat, ln_g.reshape(1, C), ln_b.reshape(1, C), w, bias.reshape(1, Cout))


# ----------------------------------------------------------------------------
# Kernel 4: fused head: avgpool -> LN -> Linear(1024,512) -> ReLU -> Linear(512,128)
#           -> ReLU -> Linear(128, P)   (P = class_size padded to 128 lanes)
# ----------------------------------------------------------------------------
def _head_kernel(x_ref, g_ref, b_ref, hw_ref, hb_ref,
                 p1w_ref, p1b_ref, p2w_ref, p2b_ref, o_ref):
    x = x_ref[...].astype(jnp.float32)            # (N, S, C)
    pooled = jnp.mean(x, axis=1)                  # (N, C)
    t = _ln(pooled, g_ref[...], b_ref[...])
    h = jnp.dot(t.astype(jnp.bfloat16), hw_ref[...],
                preferred_element_type=jnp.float32) + hb_ref[...]
    h = jnp.maximum(h, 0.0)                       # projection_layer ReLU #1
    h = jnp.dot(h.astype(jnp.bfloat16), p1w_ref[...],
                preferred_element_type=jnp.float32) + p1b_ref[...]
    h = jnp.maximum(h, 0.0)                       # projection_layer ReLU #2
    o_ref[...] = jnp.dot(h.astype(jnp.bfloat16), p2w_ref[...],
                         preferred_element_type=jnp.float32) + p2b_ref[...]


def head_and_projection(x_nsc, p):
    N, S, C = x_nsc.shape
    P = p["proj2_w"].shape[1]
    out = pl.pallas_call(
        _head_kernel,
        out_shape=jax.ShapeDtypeStruct((N, P), jnp.float32),
        compiler_params=_cparams(),
    )(x_nsc,
      p["head_ln_g"].reshape(1, C), p["head_ln_b"].reshape(1, C),
      p["head_w"], p["head_b"].reshape(1, 512),
      p["proj1_w"], p["proj1_b"].reshape(1, 128),
      p["proj2_w"], p["proj2_b"].reshape(1, P))
    return out[:, :p["class_size"]]


# ----------------------------------------------------------------------------
# Parameters (deterministic synthetic init, stacked per-stage for block-indexed grid)
# ----------------------------------------------------------------------------
class ParamGen:
    def __init__(self, key):
        self.key = key

    def normal(self, shape, std=0.02):
        self.key, sub = jax.random.split(self.key)
        return std * jax.random.normal(sub, shape, jnp.float32)

    @staticmethod
    def zeros(shape):
        return jnp.zeros(shape, jnp.float32)

    @staticmethod
    def ones(shape):
        return jnp.ones(shape, jnp.float32)


def init_params(class_size, key):
    pg = ParamGen(key)
    bf16 = lambda a: a.astype(jnp.bfloat16)
    p = {"class_size": class_size}

    # stem: Conv2d(3->128, k=4, s=4, bias=True) as im2col matrix (f32, K=48), then LN.
    p["stem_w"] = pg.normal((4 * 4 * 3, DIMS[0]))
    p["stem_b"] = pg.zeros((DIMS[0],))
    p["stem_ln_g"], p["stem_ln_b"] = pg.ones((DIMS[0],)), pg.zeros((DIMS[0],))

    stages = []
    for si, (depth, dim) in enumerate(zip(DEPTHS, DIMS)):
        stage = dict(
            dw_w=pg.normal((depth, 49, dim)),               # 7x7 depthwise taps
            dw_b=pg.zeros((depth, 1, dim)),
            ln_g=pg.ones((depth, 1, dim)),
            ln_b=pg.zeros((depth, 1, dim)),
            fc1_w=bf16(pg.normal((depth, dim, 4 * dim))),   # bf16 MXU weights
            fc1_b=pg.zeros((depth, 1, 4 * dim)),
            fc2_w=bf16(pg.normal((depth, 4 * dim, dim))),
            fc2_b=pg.zeros((depth, 1, dim)),
            ls=jnp.full((depth, 1, dim), 1e-6, jnp.float32),
        )
        if si < 3:
            stage["down_ln_g"] = pg.ones((dim,))
            stage["down_ln_b"] = pg.zeros((dim,))
            # 2x2 taps flattened to a single (4C, Cout) matrix (tap-major rows)
            stage["down_w"] = bf16(pg.normal((4 * dim, DIMS[si + 1])))
            stage["down_b"] = pg.zeros((DIMS[si + 1],))
        stages.append(stage)
    p["stages"] = stages

    # classifier: LN(1024) -> Flatten -> Linear(1024, 512)   (replaced classifier[2])
    p["head_ln_g"], p["head_ln_b"] = pg.ones((1024,)), pg.zeros((1024,))
    p["head_w"], p["head_b"] = bf16(pg.normal((1024, 512))), pg.zeros((512,))
    # projection_layer: ReLU -> Linear(512,128) -> ReLU -> Linear(128, class_size)
    p["proj1_w"], p["proj1_b"] = bf16(pg.normal((512, 128))), pg.zeros((128,))
    P = max(128, ((class_size + 127) // 128) * 128)          # lane-dense output
    w2 = pg.normal((128, class_size))
    p["proj2_w"] = bf16(jnp.pad(w2, ((0, 0), (0, P - class_size))))
    p["proj2_b"] = pg.zeros((P,))
    return p


# ----------------------------------------------------------------------------
# Forward pass (glue is plain JAX; all heavy compute is in the Pallas kernels)
# ----------------------------------------------------------------------------
def patchify(x_hwnc, k):
    H, W, N, C = x_hwnc.shape
    Ho, Wo = H // k, W // k
    xp = x_hwnc.reshape(Ho, k, Wo, k, N, C).transpose(0, 2, 4, 1, 3, 5)
    return xp.reshape(Ho * Wo * N, k * k * C)


def custom_convnet_forward(params, x_nchw):
    N, _, H, W = x_nchw.shape
    # NCHW -> (H, W, N, C) only for patch extraction; activations are flat (H*W*N, C).
    x = jnp.transpose(x_nchw, (2, 3, 0, 1)).astype(jnp.float32)

    # stem: Conv2d(3->128, k=4, s=4) + LayerNorm, fused into one kernel
    h, w = H // 4, W // 4
    xf = stem_matmul_ln(patchify(x, 4), params["stem_w"], params["stem_b"],
                        params["stem_ln_g"], params["stem_ln_b"])   # (h*w*N, 128)

    # stages (each stage is a single block-gridded pallas_call)
    for si, stage in enumerate(params["stages"]):
        xf = run_stage(xf, stage, h, w, N, DIMS[si])
        if si < 3:
            xf = ln_downsample(xf, h, w, N, DIMS[si],
                               stage["down_ln_g"], stage["down_ln_b"],
                               stage["down_w"], stage["down_b"])
            h, w = h // 2, w // 2

    # head + projection, fully fused in one kernel
    C = DIMS[-1]
    x_nsc = jnp.transpose(xf.reshape(h, w, N, C), (2, 0, 1, 3)).reshape(N, h * w, C)
    return head_and_projection(x_nsc, params)


if __name__ == "__main__":
    CLASS_SIZE = 10
    key = jax.random.PRNGKey(0)
    k_in, k_par = jax.random.split(key)

    # Small image consistent with ConvNeXt's /32 total stride: (batch=2, 3, 32, 32) NCHW.
    x = jax.random.normal(k_in, (2, 3, 32, 32), jnp.float32)
    params = init_params(CLASS_SIZE, k_par)

    logits = custom_convnet_forward(params, x)
    logits = jax.block_until_ready(logits)

    assert logits.shape == (2, CLASS_SIZE), logits.shape
    assert bool(jnp.all(jnp.isfinite(logits)))
    print("KERNEL_OK")
</pallas_src>

<mosaic_0001>
module attributes {stable_mosaic.version = 11 : i64} {
  func.func @_stem_kernel(%arg0: i32, %arg1: memref<128x48xf32, #tpu.memory_space<vmem>>, %arg2: memref<48x128xf32, #tpu.memory_space<vmem>>, %arg3: memref<1x128xf32, #tpu.memory_space<vmem>>, %arg4: memref<1x128xf32, #tpu.memory_space<vmem>>, %arg5: memref<1x128xf32, #tpu.memory_space<vmem>>, %arg6: memref<128x128xf32, #tpu.memory_space<vmem>>) attributes {dimension_semantics = [#tpu.dimension_semantics<parallel>], iteration_bounds = array<i64: 1>, scalar_prefetch = 0 : i64, scratch_operands = 0 : i64, tpu.core_type = #tpu.core_type<tc>, window_params = [{transform_indices = @transform_0, window_bounds = array<i64: 128, 48>}, {pipeline_mode = #tpu.pipeline_mode<synchronous>, transform_indices = @transform_1, window_bounds = array<i64: 48, 128>}, {pipeline_mode = #tpu.pipeline_mode<synchronous>, transform_indices = @transform_2, window_bounds = array<i64: 1, 128>}, {pipeline_mode = #tpu.pipeline_mode<synchronous>, transform_indices = @transform_3, window_bounds = array<i64: 1, 128>}, {pipeline_mode = #tpu.pipeline_mode<synchronous>, transform_indices = @transform_4, window_bounds = array<i64: 1, 128>}, {transform_indices = @transform_5, window_bounds = array<i64: 128, 128>}]} {
    %c0 = arith.constant 0 : index
    %c0_0 = arith.constant 0 : index
    %0 = vector.load %arg1[%c0, %c0_0] : memref<128x48xf32, #tpu.memory_space<vmem>>, vector<128x48xf32>
    %c0_1 = arith.constant 0 : index
    %c0_2 = arith.constant 0 : index
    %1 = vector.load %arg2[%c0_1, %c0_2] : memref<48x128xf32, #tpu.memory_space<vmem>>, vector<48x128xf32>
    %cst = arith.constant dense<0.000000e+00> : vector<128x128xf32>
    %2 = tpu.matmul %0, %1, %cst {dimension_numbers = #tpu.dot_dimension_numbers<[1], [0], [0], [1], [0, 0, 1, 1], [], []>} : vector<128x48xf32>, vector<48x128xf32>, vector<128x128xf32> -> vector<128x128xf32>
    %c0_3 = arith.constant 0 : index
    %c0_4 = arith.constant 0 : index
    %3 = vector.load %arg3[%c0_3, %c0_4] : memref<1x128xf32, #tpu.memory_space<vmem>>, vector<1x128xf32>
    %4 = vector.broadcast %3 : vector<1x128xf32> to vector<128x128xf32>
    %5 = arith.addf %2, %4 : vector<128x128xf32>
    %c0_5 = arith.constant 0 : index
    %c0_6 = arith.constant 0 : index
    %6 = vector.load %arg4[%c0_5, %c0_6] : memref<1x128xf32, #tpu.memory_space<vmem>>, vector<1x128xf32>
    %c0_7 = arith.constant 0 : index
    %c0_8 = arith.constant 0 : index
    %7 = vector.load %arg5[%c0_7, %c0_8] : memref<1x128xf32, #tpu.memory_space<vmem>>, vector<1x128xf32>
    %cst_9 = arith.constant dense<0.000000e+00> : vector<128xf32>
    %8 = vector.multi_reduction <add>, %5, %cst_9 [1] : vector<128x128xf32> to vector<128xf32>
    %9 = vector.shape_cast %8 : vector<128xf32> to vector<128x1xf32>
    %cst_10 = arith.constant 1.280000e+02 : f32
    %10 = vector.broadcast %cst_10 : f32 to vector<128x1xf32>
    %11 = arith.divf %9, %10 : vector<128x1xf32>
    %12 = vector.broadcast %11 : vector<128x1xf32> to vector<128x128xf32>
    %13 = arith.subf %5, %12 : vector<128x128xf32>
    %14 = arith.mulf %13, %13 : vector<128x128xf32>
    %cst_11 = arith.constant dense<0.000000e+00> : vector<128xf32>
    %15 = vector.multi_reduction <add>, %14, %cst_11 [1] : vector<128x128xf32> to vector<128xf32>
    %16 = vector.shape_cast %15 : vector<128xf32> to vector<128x1xf32>
    %cst_12 = arith.constant 1.280000e+02 : f32
    %17 = vector.broadcast %cst_12 : f32 to vector<128x1xf32>
    %18 = arith.divf %16, %17 : vector<128x1xf32>
    %cst_13 = arith.constant 9.99999997E-7 : f32
    %19 = vector.broadcast %cst_13 : f32 to vector<128x1xf32>
    %20 = arith.addf %18, %19 : vector<128x1xf32>
    %21 = math.rsqrt %20 : vector<128x1xf32>
    %22 = vector.broadcast %21 : vector<128x1xf32> to vector<128x128xf32>
    %23 = arith.mulf %13, %22 : vector<128x128xf32>
    %24 = vector.broadcast %6 : vector<1x128xf32> to vector<128x128xf32>
    %25 = arith.mulf %23, %24 : vector<128x128xf32>
    %26 = vector.broadcast %7 : vector<1x128xf32> to vector<128x128xf32>
    %27 = arith.addf %25, %26 : vector<128x128xf32>
    %c0_14 = arith.constant 0 : index
    %c0_15 = arith.constant 0 : index
    %28 = vector.load %arg6[%c0_14, %c0_15] : memref<128x128xf32, #tpu.memory_space<vmem>>, vector<128x128xf32>
    tpu.vector_store %arg6[%c0_14, %c0_15], %27 {strides = array<i32>} : memref<128x128xf32, #tpu.memory_space<vmem>>, vector<128x128xf32>,
    return
  }
  func.func @transform_0(%arg0: i32) -> (i32, i32) {
    %c0_i32 = arith.constant 0 : i32
    %c0_i32_0 = arith.constant 0 : i32
    return %arg0, %c0_i32 : i32, i32
  }
  func.func @transform_1(%arg0: i32) -> (i32, i32) {
    %c0_i32 = arith.constant 0 : i32
    %c0_i32_0 = arith.constant 0 : i32
    %c0_i32_1 = arith.constant 0 : i32
    return %c0_i32, %c0_i32_0 : i32, i32
  }
  func.func @transform_2(%arg0: i32) -> (i32, i32) {
    %c0_i32 = arith.constant 0 : i32
    %c0_i32_0 = arith.constant 0 : i32
    %c0_i32_1 = arith.constant 0 : i32
    return %c0_i32, %c0_i32_0 : i32, i32
  }
  func.func @transform_3(%arg0: i32) -> (i32, i32) {
    %c0_i32 = arith.constant 0 : i32
    %c0_i32_0 = arith.constant 0 : i32
    %c0_i32_1 = arith.constant 0 : i32
    return %c0_i32, %c0_i32_0 : i32, i32
  }
  func.func @transform_4(%arg0: i32) -> (i32, i32) {
    %c0_i32 = arith.constant 0 : i32
    %c0_i32_0 = arith.constant 0 : i32
    %c0_i32_1 = arith.constant 0 : i32
    return %c0_i32, %c0_i32_0 : i32, i32
  }
  func.func @transform_5(%arg0: i32) -> (i32, i32) {
    %c0_i32 = arith.constant 0 : i32
    %c0_i32_0 = arith.constant 0 : i32
    return %arg0, %c0_i32 : i32, i32
  }
}

</mosaic_0001>

<llo_original>
// kernel: tpu_custom_call.1
$region0: #{tpu_custom_call.1}
  #allocation0 [shape = 'u32[]', space=smem, size = 0x4, offset = 0x4, fixed_abs, tag = 'smem constant byte address 0x4 - core index']
  #allocation1 [shape = 'u32[144,128]{1,0:T(1,128)}', space=vmem, size = 0x12000, scoped, tag = 'internal scratch']
  %s0 = inlined_call_operand.vmem [shape: f32[128,48], index: 0, kind: input, shape index: {}]
  %s1 = inlined_call_operand.vmem [shape: f32[48,128], index: 1, kind: input, shape index: {}]
  %s2 = inlined_call_operand.vmem [shape: f32[1,128], index: 2, kind: input, shape index: {}]
  %s3 = inlined_call_operand.vmem [shape: f32[1,128], index: 3, kind: input, shape index: {}]
  %s4 = inlined_call_operand.vmem [shape: f32[1,128], index: 4, kind: input, shape index: {}]
  %s5 = inlined_call_operand.hbm [shape: f32[128,128], index: 5, kind: output, shape index: {}]
  %s6 = sld [smem:[#allocation0]]
  $region30: #{tpu_custom_call.1} parent=0
    _
  %s8 = ssub.s32 1, %s6
  %s9 = scalar_select 0, %s8, %s6
  $region1: #{tpu_custom_call.1} parent=0
    #allocation2 [shape = 'u8[65536]{0}', space=vmem, size = 0x10000, scoped, tag = 'output window, operand 0, single buffered']
    #allocation3 [shape = 's32[1]{0}', space=sflag, size = 0x4, scoped, tag = 'scoped memory for tpu_custom_call.1']
    %10 = vsyncpa [#allocation3], 0
    // Predicated region
    $region2: #{tpu_custom_call.1} parent=1 // pred_check
      _
    $region3: #{tpu_custom_call.1} parent=1 // pred_check_branch
      %12 = sbr.rel (0) target = $region5
    $region4: #{tpu_custom_call.1} parent=1 // pred_region
      _
    $region5: #{tpu_custom_call.1} parent=1 // pred_fallthru
      _
    // Predicated region
    $region6: #{tpu_custom_call.1} parent=1 // pred_check
      _
    $region7: #{tpu_custom_call.1} parent=1 // pred_check_branch
      %14 = sbr.rel (0) target = $region9
    $region8: #{tpu_custom_call.1} parent=1 // pred_region
      _
    $region9: #{tpu_custom_call.1} parent=1 // pred_fallthru
      _
    // Predicated region
    $region10: #{tpu_custom_call.1} parent=1 // pred_check
      _
    $region11: #{tpu_custom_call.1} parent=1 // pred_check_branch
      %16 = sbr.rel (0) target = $region13
    $region12: #{tpu_custom_call.1} parent=1 // pred_region
      _
    $region13: #{tpu_custom_call.1} parent=1 // pred_fallthru
      _
    // Predicated region
    $region14: #{tpu_custom_call.1} parent=1 // pred_check
      _
    $region15: #{tpu_custom_call.1} parent=1 // pred_check_branch
      %18 = sbr.rel (0) target = $region17
    $region16: #{tpu_custom_call.1} parent=1 // pred_region
      _
    $region17: #{tpu_custom_call.1} parent=1 // pred_fallthru
      _
    // Predicated region
    $region18: #{tpu_custom_call.1} parent=1 // pred_check
      _
    $region19: #{tpu_custom_call.1} parent=1 // pred_check_branch
      %20 = sbr.rel (0) target = $region21
    $region20: #{tpu_custom_call.1} parent=1 // pred_region
      _
    $region21: #{tpu_custom_call.1} parent=1 // pred_fallthru
      _
    %v21 = vld [vmem:[%s0] sm:$0xff]
    %v22 = vld [vmem:[%s0 + $0x8] sm:$0xff]
    %v23 = vld [vmem:[%s0 + $0x10] sm:$0xff]
    %v24 = vld [vmem:[%s0 + $0x18] sm:$0xff]
    %v25 = vld [vmem:[%s0 + $0x20] sm:$0xff]
    %v26 = vld [vmem:[%s0 + $0x28] sm:$0xff]
    %v27 = vld [vmem:[%s0 + $0x30] sm:$0xff]
    %v28 = vld [vmem:[%s0 + $0x38] sm:$0xff]
    %v29 = vld [vmem:[%s0 + $0x40] sm:$0xff]
    %v30 = vld [vmem:[%s0 + $0x48] sm:$0xff]
    %v31 = vld [vmem:[%s0 + $0x50] sm:$0xff]
    %v32 = vld [vmem:[%s0 + $0x58] sm:$0xff]
    %v33 = vld [vmem:[%s0 + $0x60] sm:$0xff]
    %v34 = vld [vmem:[%s0 + $0x68] sm:$0xff]
    %v35 = vld [vmem:[%s0 + $0x70] sm:$0xff]
    %v36 = vld [vmem:[%s0 + $0x78] sm:$0xff]
    %v37 = vld [vmem:[%s1] sm:$0xff]
    %v38 = vld [vmem:[%s1 + $0x8] sm:$0xff]
    %v39 = vld [vmem:[%s1 + $0x10] sm:$0xff]
    %v40 = vld [vmem:[%s1 + $0x18] sm:$0xff]
    %v41 = vld [vmem:[%s1 + $0x20] sm:$0xff]
    %v42 = vld [vmem:[%s1 + $0x28] sm:$0xff]
    %v43 = vld [vmem:[%s2] sm:$0x1]
    %v45 = vlaneseq
    %v46 = vshrl.u32 %v45, 7
    %v47 = vsub.s32 0, %v46
    %v48 = vrot.slane %v43, %v47
    %vm50 = vcmask 392192
    %v52 = vsel %vm50, %v21, 0
    %v55 = vsel %vm50, %v22, 0
    %v58 = vsel %vm50, %v23, 0
    %v61 = vsel %vm50, %v24, 0
    %v64 = vsel %vm50, %v25, 0
    %v67 = vsel %vm50, %v26, 0
    %v70 = vsel %vm50, %v27, 0
    %v73 = vsel %vm50, %v28, 0
    %v76 = vsel %vm50, %v29, 0
    %v79 = vsel %vm50, %v30, 0
    %v82 = vsel %vm50, %v31, 0
    %v85 = vsel %vm50, %v32, 0
    %v88 = vsel %vm50, %v33, 0
    %v91 = vsel %vm50, %v34, 0
    %v94 = vsel %vm50, %v35, 0
    %v97 = vsel %vm50, %v36, 0
    %99 = vmatprep.subr.mxu0 0.0
    %100 = vmatpush1.msra.mxu0 %v37
    %101 = vmatprep.subr.mxu0 0.0
    %102 = vmatpush1.msra.mxu0 %v38
    %103 = vmatprep.subr.mxu0 0.0
    %104 = vmatpush1.msra.mxu0 %v39
    %105 = vmatprep.subr.mxu0 0.0
    %106 = vmatpush1.msra.mxu0 %v40
    %107 = vmatprep.subr.mxu0 0.0
    %108 = vmatpush1.msra.mxu0 %v41
    %109 = vmatprep.subr.mxu0 0.0
    %110 = vmatpush1.msra.mxu0 %v42
    %111 = vmatprep.subr.mxu0 0.0
    %112 = vmatpush1.msra.mxu0 0.0
    %113 = vmatprep.subr.mxu0 0.0
    %114 = vmatpush1.msra.mxu0 0.0
    %115 = vmatprep.subr.mxu0 0.0
    %116 = vmatpush1.msra.mxu0 0.0
    %117 = vmatprep.subr.mxu0 0.0
    %118 = vmatpush1.msra.mxu0 0.0
    %119 = vmatprep.subr.mxu0 0.0
    %120 = vmatpush1.msra.mxu0 0.0
    %121 = vmatprep.subr.mxu0 0.0
    %122 = vmatpush1.msra.mxu0 0.0
    %123 = vmatprep.subr.mxu0 0.0
    %124 = vmatpush1.msra.mxu0 0.0
    %125 = vmatprep.subr.mxu0 0.0
    %126 = vmatpush1.msra.mxu0 0.0
    %127 = vmatprep.subr.mxu0 0.0
    %128 = vmatpush1.msra.mxu0 0.0
    %129 = vmatprep.subr.mxu0 0.0
    %130 = vmatpush1.msra.mxu0 0.0
    %131 = vmatprep.subr.mxu0 0.0
    %132 = vmatpush1.msra.mxu0 0.0
    %133 = vmatprep.subr.mxu0 0.0
    %134 = vmatpush1.msra.mxu0 0.0
    %135 = vmatprep.subr.mxu0 0.0
    %136 = vmatpush1.msra.mxu0 0.0
    %137 = vmatprep.subr.mxu0 0.0
    %138 = vmatpush1.msra.mxu0 0.0
    %139 = vmatprep.subr.mxu0 0.0
    %140 = vmatpush1.msra.mxu0 0.0
    %141 = vmatprep.subr.mxu0 0.0
    %142 = vmatpush1.msra.mxu0 0.0
    %143 = vmatprep.subr.mxu0 0.0
    %144 = vmatpush1.msra.mxu0 0.0
    %145 = vmatprep.subr.mxu0 0.0
    %146 = vmatpush1.msra.mxu0 0.0
    %147 = vmatprep.subr.mxu0 0.0
    %148 = vmatpush1.msra.mxu0 0.0
    %149 = vmatprep.subr.mxu0 0.0
    %150 = vmatpush1.msra.mxu0 0.0
    %151 = vmatprep.subr.mxu0 0.0
    %152 = vmatpush1.msra.mxu0 0.0
    %153 = vmatprep.subr.mxu0 0.0
    %154 = vmatpush1.msra.mxu0 0.0
    %155 = vmatprep.subr.mxu0 0.0
    %156 = vmatpush1.msra.mxu0 0.0
    %157 = vmatprep.subr.mxu0 0.0
    %158 = vmatpush1.msra.mxu0 0.0
    %159 = vmatprep.subr.mxu0 0.0
    %160 = vmatpush1.msra.mxu0 0.0
    %161 = vmatprep.subr.mxu0 0.0
    %162 = vmatpush1.msra.mxu0 0.0
    %163 = vmatprep.mubr.f32.mxu0 0.0
    %164 = vmatmul.mubr.f32.gmra.mrb[0].mxu0 %v52
    %v165 = vpop.f32.mrb[0].mxu0
    %v166 = vadd.f32 %v48, %v165
    %v167 = vpop.f32.mrb[0].mxu0
    %168 = vmatprep.mubr.f32.mxu0 0.0
    %169 = vmatmul.mubr.f32.gmra.mrb[0].mxu0 %v55
    %v170 = vpop.f32.mrb[0].mxu0
    %v171 = vadd.f32 %v48, %v170
    %v172 = vpop.f32.mrb[0].mxu0
    %173 = vmatprep.mubr.f32.mxu0 0.0
    %174 = vmatmul.mubr.f32.gmra.mrb[0].mxu0 %v58
    %v175 = vpop.f32.mrb[0].mxu0
    %v176 = vadd.f32 %v48, %v175
    %v177 = vpop.f32.mrb[0].mxu0
    %178 = vmatprep.mubr.f32.mxu0 0.0
    %179 = vmatmul.mubr.f32.gmra.mrb[0].mxu0 %v61
    %v180 = vpop.f32.mrb[0].mxu0
    %v181 = vadd.f32 %v48, %v180
    %v182 = vpop.f32.mrb[0].mxu0
    %183 = vmatprep.mubr.f32.mxu0 0.0
    %184 = vmatmul.mubr.f32.gmra.mrb[0].mxu0 %v64
    %v185 = vpop.f32.mrb[0].mxu0
    %v186 = vadd.f32 %v48, %v185
    %v187 = vpop.f32.mrb[0].mxu0
    %188 = vmatprep.mubr.f32.mxu0 0.0
    %189 = vmatmul.mubr.f32.gmra.mrb[0].mxu0 %v67
    %v190 = vpop.f32.mrb[0].mxu0
    %v191 = vadd.f32 %v48, %v190
    %v192 = vpop.f32.mrb[0].mxu0
    %193 = vmatprep.mubr.f32.mxu0 0.0
    %194 = vmatmul.mubr.f32.gmra.mrb[0].mxu0 %v70
    %v195 = vpop.f32.mrb[0].mxu0
    %v196 = vadd.f32 %v48, %v195
    %v197 = vpop.f32.mrb[0].mxu0
    %198 = vmatprep.mubr.f32.mxu0 0.0
    %199 = vmatmul.mubr.f32.gmra.mrb[0].mxu0 %v73
    %v200 = vpop.f32.mrb[0].mxu0
    %v201 = vadd.f32 %v48, %v200
    %v202 = vpop.f32.mrb[0].mxu0
    %203 = vmatprep.mubr.f32.mxu0 0.0
    %204 = vmatmul.mubr.f32.gmra.mrb[0].mxu0 %v76
    %v205 = vpop.f32.mrb[0].mxu0
    %v206 = vadd.f32 %v48, %v205
    %v207 = vpop.f32.mrb[0].mxu0
    %208 = vmatprep.mubr.f32.mxu0 0.0
    %209 = vmatmul.mubr.f32.gmra.mrb[0].mxu0 %v79
    %v210 = vpop.f32.mrb[0].mxu0
    %v211 = vadd.f32 %v48, %v210
    %v212 = vpop.f32.mrb[0].mxu0
    %213 = vmatprep.mubr.f32.mxu0 0.0
    %214 = vmatmul.mubr.f32.gmra.mrb[0].mxu0 %v82
    %v215 = vpop.f32.mrb[0].mxu0
    %v216 = vadd.f32 %v48, %v215
    %v217 = vpop.f32.mrb[0].mxu0
    %218 = vmatprep.mubr.f32.mxu0 0.0
    %219 = vmatmul.mubr.f32.gmra.mrb[0].mxu0 %v85
    %v220 = vpop.f32.mrb[0].mxu0
    %v221 = vadd.f32 %v48, %v220
    %v222 = vpop.f32.mrb[0].mxu0
    %223 = vmatprep.mubr.f32.mxu0 0.0
    %224 = vmatmul.mubr.f32.gmra.mrb[0].mxu0 %v88
    %v225 = vpop.f32.mrb[0].mxu0
    %v226 = vadd.f32 %v48, %v225
    %v227 = vpop.f32.mrb[0].mxu0
    %228 = vmatprep.mubr.f32.mxu0 0.0
    %229 = vmatmul.mubr.f32.gmra.mrb[0].mxu0 %v91
    %v230 = vpop.f32.mrb[0].mxu0
    %v231 = vadd.f32 %v48, %v230
    %v232 = vpop.f32.mrb[0].mxu0
    %233 = vmatprep.mubr.f32.mxu0 0.0
    %234 = vmatmul.mubr.f32.gmra.mrb[0].mxu0 %v94
    %v235 = vpop.f32.mrb[0].mxu0
    %v236 = vadd.f32 %v48, %v235
    %v237 = vpop.f32.mrb[0].mxu0
    %238 = vmatprep.mubr.f32.mxu0 0.0
    %239 = vmatmul.mubr.f32.gmra.mrb[0].mxu0 %v97
    %v240 = vpop.f32.mrb[0].mxu0
    %v241 = vadd.f32 %v48, %v240
    %v242 = vpop.f32.mrb[0].mxu0
    %243 = vdwg.mxu0
    %v244 = vld [vmem:[%s3] sm:$0x1]
    %v245 = vld [vmem:[%s4] sm:$0x1]
    %246 = vadd.xlane.f32.xlu0 %v166
    %v247 = vpop.xlane.xlu0 %246
    %248 = vadd.xlane.f32.xlu0 %v171
    %v249 = vpop.xlane.xlu0 %248
    %250 = vadd.xlane.f32.xlu0 %v176
    %v251 = vpop.xlane.xlu0 %250
    %252 = vadd.xlane.f32.xlu0 %v181
    %v253 = vpop.xlane.xlu0 %252
    %254 = vadd.xlane.f32.xlu0 %v186
    %v255 = vpop.xlane.xlu0 %254
    %256 = vadd.xlane.f32.xlu0 %v191
    %v257 = vpop.xlane.xlu0 %256
    %258 = vadd.xlane.f32.xlu0 %v196
    %v259 = vpop.xlane.xlu0 %258
    %260 = vadd.xlane.f32.xlu0 %v201
    %v261 = vpop.xlane.xlu0 %260
    %262 = vadd.xlane.f32.xlu0 %v206
    %v263 = vpop.xlane.xlu0 %262
    %264 = vadd.xlane.f32.xlu0 %v211
    %v265 = vpop.xlane.xlu0 %264
    %266 = vadd.xlane.f32.xlu0 %v216
    %v267 = vpop.xlane.xlu0 %266
    %268 = vadd.xlane.f32.xlu0 %v221
    %v269 = vpop.xlane.xlu0 %268
    %270 = vadd.xlane.f32.xlu0 %v226
    %v271 = vpop.xlane.xlu0 %270
    %272 = vadd.xlane.f32.xlu0 %v231
    %v273 = vpop.xlane.xlu0 %272
    %274 = vadd.xlane.f32.xlu0 %v236
    %v275 = vpop.xlane.xlu0 %274
    %276 = vadd.xlane.f32.xlu0 %v241
    %v277 = vpop.xlane.xlu0 %276
    %v278 = vrcp.pop 128.0
    %v279 = vmul.f32 %v247, %v278
    %v280 = vmul.f32 %v249, %v278
    %v281 = vmul.f32 %v251, %v278
    %v282 = vmul.f32 %v253, %v278
    %v283 = vmul.f32 %v255, %v278
    %v284 = vmul.f32 %v257, %v278
    %v285 = vmul.f32 %v259, %v278
    %v286 = vmul.f32 %v261, %v278
    %v287 = vmul.f32 %v263, %v278
    %v288 = vmul.f32 %v265, %v278
    %v289 = vmul.f32 %v267, %v278
    %v290 = vmul.f32 %v269, %v278
    %v291 = vmul.f32 %v271, %v278
    %v292 = vmul.f32 %v273, %v278
    %v293 = vmul.f32 %v275, %v278
    %v294 = vmul.f32 %v277, %v278
    %v295 = vsub.f32 %v166, %v279
    %v296 = vsub.f32 %v171, %v280
    %v297 = vsub.f32 %v176, %v281
    %v298 = vsub.f32 %v181, %v282
    %v299 = vsub.f32 %v186, %v283
    %v300 = vsub.f32 %v191, %v284
    %v301 = vsub.f32 %v196, %v285
    %v302 = vsub.f32 %v201, %v286
    %v303 = vsub.f32 %v206, %v287
    %v304 = vsub.f32 %v211, %v288
    %v305 = vsub.f32 %v216, %v289
    %v306 = vsub.f32 %v221, %v290
    %v307 = vsub.f32 %v226, %v291
    %v308 = vsub.f32 %v231, %v292
    %v309 = vsub.f32 %v236, %v293
    %v310 = vsub.f32 %v241, %v294
    %v311 = vmul.f32 %v295, %v295
    %v312 = vmul.f32 %v296, %v296
    %v313 = vmul.f32 %v297, %v297
    %v314 = vmul.f32 %v298, %v298
    %v315 = vmul.f32 %v299, %v299
    %v316 = vmul.f32 %v300, %v300
    %v317 = vmul.f32 %v301, %v301
    %v318 = vmul.f32 %v302, %v302
    %v319 = vmul.f32 %v303, %v303
    %v320 = vmul.f32 %v304, %v304
    %v321 = vmul.f32 %v305, %v305
    %v322 = vmul.f32 %v306, %v306
    %v323 = vmul.f32 %v307, %v307
    %v324 = vmul.f32 %v308, %v308
    %v325 = vmul.f32 %v309, %v309
    %v326 = vmul.f32 %v310, %v310
    %327 = vadd.xlane.f32.xlu0 %v311
    %v328 = vpop.xlane.xlu0 %327
    %329 = vadd.xlane.f32.xlu0 %v312
    %v330 = vpop.xlane.xlu0 %329
    %331 = vadd.xlane.f32.xlu0 %v313
    %v332 = vpop.xlane.xlu0 %331
    %333 = vadd.xlane.f32.xlu0 %v314
    %v334 = vpop.xlane.xlu0 %333
    %335 = vadd.xlane.f32.xlu0 %v315
    %v336 = vpop.xlane.xlu0 %335
    %337 = vadd.xlane.f32.xlu0 %v316
    %v338 = vpop.xlane.xlu0 %337
    %339 = vadd.xlane.f32.xlu0 %v317
    %v340 = vpop.xlane.xlu0 %339
    %341 = vadd.xlane.f32.xlu0 %v318
    %v342 = vpop.xlane.xlu0 %341
    %343 = vadd.xlane.f32.xlu0 %v319
    %v344 = vpop.xlane.xlu0 %343
    %345 = vadd.xlane.f32.xlu0 %v320
    %v346 = vpop.xlane.xlu0 %345
    %347 = vadd.xlane.f32.xlu0 %v321
    %v348 = vpop.xlane.xlu0 %347
    %349 = vadd.xlane.f32.xlu0 %v322
    %v350 = vpop.xlane.xlu0 %349
    %351 = vadd.xlane.f32.xlu0 %v323
    %v352 = vpop.xlane.xlu0 %351
    %353 = vadd.xlane.f32.xlu0 %v324
    %v354 = vpop.xlane.xlu0 %353
    %355 = vadd.xlane.f32.xlu0 %v325
    %v356 = vpop.xlane.xlu0 %355
    %357 = vadd.xlane.f32.xlu0 %v326
    %v358 = vpop.xlane.xlu0 %357
    %v359 = vmul.f32 %v328, %v278
    %v360 = vmul.f32 %v330, %v278
    %v361 = vmul.f32 %v332, %v278
    %v362 = vmul.f32 %v334, %v278
    %v363 = vmul.f32 %v336, %v278
    %v364 = vmul.f32 %v338, %v278
    %v365 = vmul.f32 %v340, %v278
    %v366 = vmul.f32 %v342, %v278
    %v367 = vmul.f32 %v344, %v278
    %v368 = vmul.f32 %v346, %v278
    %v369 = vmul.f32 %v348, %v278
    %v370 = vmul.f32 %v350, %v278
    %v371 = vmul.f32 %v352, %v278
    %v372 = vmul.f32 %v354, %v278
    %v373 = vmul.f32 %v356, %v278
    %v374 = vmul.f32 %v358, %v278
    %v375 = vadd.f32 %v359, 1e-06
    %v376 = vadd.f32 %v360, 1e-06
    %v377 = vadd.f32 %v361, 1e-06
    %v378 = vadd.f32 %v362, 1e-06
    %v379 = vadd.f32 %v363, 1e-06
    %v380 = vadd.f32 %v364, 1e-06
    %v381 = vadd.f32 %v365, 1e-06
    %v382 = vadd.f32 %v366, 1e-06
    %v383 = vadd.f32 %v367, 1e-06
    %v384 = vadd.f32 %v368, 1e-06
    %v385 = vadd.f32 %v369, 1e-06
    %v386 = vadd.f32 %v370, 1e-06
    %v387 = vadd.f32 %v371, 1e-06
    %v388 = vadd.f32 %v372, 1e-06
    %v389 = vadd.f32 %v373, 1e-06
    %v390 = vadd.f32 %v374, 1e-06
    %v391 = vrsqrt.pop %v375
    %v392 = vrsqrt.pop %v376
    %v393 = vrsqrt.pop %v377
    %v394 = vrsqrt.pop %v378
    %v395 = vrsqrt.pop %v379
    %v396 = vrsqrt.pop %v380
    %v397 = vrsqrt.pop %v381
    %v398 = vrsqrt.pop %v382
    %v399 = vrsqrt.pop %v383
    %v400 = vrsqrt.pop %v384
    %v401 = vrsqrt.pop %v385
    %v402 = vrsqrt.pop %v386
    %v403 = vrsqrt.pop %v387
    %v404 = vrsqrt.pop %v388
    %v405 = vrsqrt.pop %v389
    %v406 = vrsqrt.pop %v390
    %v407 = vmul.f32 %v295, %v391
    %v408 = vmul.f32 %v296, %v392
    %v409 = vmul.f32 %v297, %v393
    %v410 = vmul.f32 %v298, %v394
    %v411 = vmul.f32 %v299, %v395
    %v412 = vmul.f32 %v300, %v396
    %v413 = vmul.f32 %v301, %v397
    %v414 = vmul.f32 %v302, %v398
    %v415 = vmul.f32 %v303, %v399
    %v416 = vmul.f32 %v304, %v400
    %v417 = vmul.f32 %v305, %v401
    %v418 = vmul.f32 %v306, %v402
    %v419 = vmul.f32 %v307, %v403
    %v420 = vmul.f32 %v308, %v404
    %v421 = vmul.f32 %v309, %v405
    %v422 = vmul.f32 %v310, %v406
    %v424 = vlaneseq
    %v425 = vshrl.u32 %v424, 7
    %v426 = vsub.s32 0, %v425
    %v427 = vrot.slane %v244, %v426
    %v429 = vmul.f32 %v407, %v427
    %v430 = vmul.f32 %v408, %v427
    %v431 = vmul.f32 %v409, %v427
    %v432 = vmul.f32 %v410, %v427
    %v433 = vmul.f32 %v411, %v427
    %v434 = vmul.f32 %v412, %v427
    %v435 = vmul.f32 %v413, %v427
    %v436 = vmul.f32 %v414, %v427
    %v437 = vmul.f32 %v415, %v427
    %v438 = vmul.f32 %v416, %v427
    %v439 = vmul.f32 %v417, %v427
    %v440 = vmul.f32 %v418, %v427
    %v441 = vmul.f32 %v419, %v427
    %v442 = vmul.f32 %v420, %v427
    %v443 = vmul.f32 %v421, %v427
    %v444 = vmul.f32 %v422, %v427
    %v446 = vlaneseq
    %v447 = vshrl.u32 %v446, 7
    %v448 = vsub.s32 0, %v447
    %v449 = vrot.slane %v245, %v448
    %v451 = vadd.f32 %v429, %v449
    %v452 = vadd.f32 %v430, %v449
    %v453 = vadd.f32 %v431, %v449
    %v454 = vadd.f32 %v432, %v449
    %v455 = vadd.f32 %v433, %v449
    %v456 = vadd.f32 %v434, %v449
    %v457 = vadd.f32 %v435, %v449
    %v458 = vadd.f32 %v436, %v449
    %v459 = vadd.f32 %v437, %v449
    %v460 = vadd.f32 %v438, %v449
    %v461 = vadd.f32 %v439, %v449
    %v462 = vadd.f32 %v440, %v449
    %v463 = vadd.f32 %v441, %v449
    %v464 = vadd.f32 %v442, %v449
    %v465 = vadd.f32 %v443, %v449
    %v466 = vadd.f32 %v444, %v449
    %467 = vst [vmem:[#allocation2] sm:$0xff] %v451
    %468 = vst [vmem:[#allocation2 + $0x8] sm:$0xff] %v452
    %469 = vst [vmem:[#allocation2 + $0x10] sm:$0xff] %v453
    %470 = vst [vmem:[#allocation2 + $0x18] sm:$0xff] %v454
    %471 = vst [vmem:[#allocation2 + $0x20] sm:$0xff] %v455
    %472 = vst [vmem:[#allocation2 + $0x28] sm:$0xff] %v456
    %473 = vst [vmem:[#allocation2 + $0x30] sm:$0xff] %v457
    %474 = vst [vmem:[#allocation2 + $0x38] sm:$0xff] %v458
    %475 = vst [vmem:[#allocation2 + $0x40] sm:$0xff] %v459
    %476 = vst [vmem:[#allocation2 + $0x48] sm:$0xff] %v460
    %477 = vst [vmem:[#allocation2 + $0x50] sm:$0xff] %v461
    %478 = vst [vmem:[#allocation2 + $0x58] sm:$0xff] %v462
    %479 = vst [vmem:[#allocation2 + $0x60] sm:$0xff] %v463
    %480 = vst [vmem:[#allocation2 + $0x68] sm:$0xff] %v464
    %481 = vst [vmem:[#allocation2 + $0x70] sm:$0xff] %v465
    %482 = vst [vmem:[#allocation2 + $0x78] sm:$0xff] %v466
    // Predicated region
    $region22: #{tpu_custom_call.1} parent=1 // pred_check
      _
    $region23: #{tpu_custom_call.1} parent=1 // pred_check_branch
      %484 = sbr.rel (0) target = $region25
    $region24: #{tpu_custom_call.1} parent=1 // pred_region
      %s486 = ssub.s32 2048, 2048
      %487 = vsyncadd [#allocation3], %s486
      %s488 = sshll.u32 [#allocation2], 4
      %s489 = int_to_ptr.vmem [resolvable:$true] %s488
      %494 = dma.vmem_to_hbm [thread:$0]  %s489, 2048, %s5, [#allocation3], 128, 128, 8
    $region25: #{tpu_custom_call.1} parent=1 // pred_fallthru
      _
    // Predicated region
    $region26: #{tpu_custom_call.1} parent=1 // pred_check
      _
    $region27: #{tpu_custom_call.1} parent=1 // pred_check_branch
      %496 = sbr.rel (0) target = $region29
    $region28: #{tpu_custom_call.1} parent=1 // pred_region
      %497 = dma.done [#allocation3], 2048
    $region29: #{tpu_custom_call.1} parent=1 // pred_fallthru
      _
    %498 = vsyncpa [#allocation3], 1

</llo_original>
